<compile_context>
chip_gen: v7x
topology: tpu7x:2x2x1
jax: 0.10.0
libtpu: 0.0.40
codegen_flags: <defaults>
</compile_context>

<pallas_src>
import functools

import jax
import jax.numpy as jnp
from jax.experimental import pallas as pl
from jax.experimental.pallas import tpu as pltpu

_LANES = 128
_SUBLANES = 8


def _round_up(x, m):
    return ((x + m - 1) // m) * m


def _loss_kernel(pred_ref, mask_ref,
                 ce_ref, inter_ref, psq_ref, msq_ref,
                 ce_acc, inter_acc, psq_acc, msq_acc,
                 *, hw, tiles_per_split, needs_mask):
    i = pl.program_id(2)
    num_classes, rt, lanes = pred_ref.shape          # (C, rt, 128)
    acc_rows = ce_acc.shape[0]
    groups = rt // acc_rows                          # exact by construction

    @pl.when(i == 0)
    def _():
        ce_acc[...] = jnp.zeros_like(ce_acc)
        inter_acc[...] = jnp.zeros_like(inter_acc)
        psq_acc[...] = jnp.zeros_like(psq_acc)
        msq_acc[...] = jnp.zeros_like(msq_acc)

    x = pred_ref[...].astype(jnp.float32)            # (C, rt, 128)
    m = mask_ref[...].astype(jnp.float32)            # (C, rt, 128)

    if needs_mask:
        # Only compiled in when lane padding or a partial edge tile exists.
        s = pl.program_id(1)
        tile = s * tiles_per_split + i
        row = jax.lax.broadcasted_iota(jnp.int32, (rt, lanes), 0) + tile * rt
        lane = jax.lax.broadcasted_iota(jnp.int32, (rt, lanes), 1)
        valid = (row * lanes + lane) < hw            # (rt, 128) bool
        validf = valid.astype(jnp.float32)
        vmask = valid[None, :, :]
        # Clamp BEFORE exp so OOB / padded garbage can never poison softmax.
        x = jnp.where(vmask, x, 0.0)
        m = jnp.where(vmask, m, 0.0)

    # Numerically stable softmax / log-softmax over the class axis (axis 0).
    xmax = jnp.max(x, axis=0, keepdims=True)
    z = x - xmax
    ez = jnp.exp(z)
    denom = jnp.sum(ez, axis=0, keepdims=True)
    r = pl.reciprocal(denom, approx=True)
    r = r * (2.0 - denom * r)                        # one Newton step -> f32 accuracy
    sm = ez * r                                      # softmax(pred, dim=1)
    logsm = z - jnp.log(denom)                       # log_softmax(pred, dim=1)

    # Per-step contributions (lane/sublane-wise only; no cross-lane work here).
    ce_c = jnp.sum(m * logsm, axis=0)                # (rt, 128); negated in wrapper
    inter_c = sm * m                                 # m already zeroed when masked
    psq_c = sm * sm
    if needs_mask:
        psq_c = psq_c * validf[None, :, :]
    msq_c = m * m

    # Pre-reduce each contribution to (*, acc_rows, 128) with cross-vreg adds
    # before touching the (small) persistent accumulators.
    if groups > 1:
        ce_c = ce_c.reshape(groups, acc_rows, lanes).sum(axis=0)
        inter_c = inter_c.reshape(num_classes, groups, acc_rows, lanes).sum(axis=1)
        psq_c = psq_c.reshape(num_classes, groups, acc_rows, lanes).sum(axis=1)
        msq_c = msq_c.reshape(num_classes, groups, acc_rows, lanes).sum(axis=1)

    ce_acc[...] = ce_acc[...] + ce_c
    inter_acc[...] = inter_acc[...] + inter_c
    psq_acc[...] = psq_acc[...] + psq_c
    msq_acc[...] = msq_acc[...] + msq_c

    # Epilogue: collapse the row (sublane) axis once per (sample, split).
    @pl.when(i == pl.num_programs(2) - 1)
    def _():
        ce_ref[...] = jnp.sum(ce_acc[...], axis=0, keepdims=True)   # (1, 128)
        inter_ref[...] = jnp.sum(inter_acc[...], axis=1)            # (C, 128)
        psq_ref[...] = jnp.sum(psq_acc[...], axis=1)                # (C, 128)
        msq_ref[...] = jnp.sum(msq_acc[...], axis=1)                # (C, 128)


def transunet_loss(prediction, mask, eps=1e-15, rows_per_step=None, row_splits=None):
    """prediction, mask: NCHW arrays (mask holds per-class probabilities / one-hot)."""
    N, C, H, W = prediction.shape
    HW = H * W
    hw_pad = _round_up(HW, _LANES)

    # NCHW -> (N, C, HW): pure reshape, no data movement.
    pred3 = prediction.reshape(N, C, HW)
    mask3 = mask.reshape(N, C, HW)
    if hw_pad != HW:
        # Uncommon (HW % 128 != 0): pad by < 128 elems so the lane reshape works.
        pad = hw_pad - HW
        pred3 = jnp.pad(pred3, ((0, 0), (0, 0), (0, pad)))
        mask3 = jnp.pad(mask3, ((0, 0), (0, 0), (0, pad)))

    R = hw_pad // _LANES

    if rows_per_step is None:
        # Target ~2-4 MiB input blocks; cap rt for larger C (vreg pressure).
        rows_per_step = 1024 if C <= 4 else (512 if C <= 8 else (256 if C <= 16 else 128))
    rows_per_step = max(_SUBLANES, _round_up(rows_per_step, _SUBLANES))

    rt = rows_per_step if R >= rows_per_step else R   # rt % 8 == 0, or rt == R (full dim)
    T = pl.cdiv(R, rt)
    needs_mask = (hw_pad != HW) or (R % rt != 0)
    acc_rows = _SUBLANES if rt % _SUBLANES == 0 else rt

    if row_splits is None:
        # Extra parallel axis so v7x megacore has something to split when N
        # alone can't balance the two cores; near-zero cost otherwise.
        S = 2 if (N % 2 == 1 and T % 2 == 0 and T >= 2) else 1
    else:
        S = row_splits if (row_splits >= 1 and T % row_splits == 0) else 1
    T_s = T // S

    pred4 = pred3.reshape(N, C, R, _LANES)
    mask4 = mask3.reshape(N, C, R, _LANES)

    kernel = functools.partial(_loss_kernel, hw=HW,
                               tiles_per_split=T_s, needs_mask=needs_mask)

    ce_p, inter_p, psq_p, msq_p = pl.pallas_call(
        kernel,
        out_shape=(
            jax.ShapeDtypeStruct((N, S, 1, _LANES), jnp.float32),
            jax.ShapeDtypeStruct((N, S, C, _LANES), jnp.float32),
            jax.ShapeDtypeStruct((N, S, C, _LANES), jnp.float32),
            jax.ShapeDtypeStruct((N, S, C, _LANES), jnp.float32),
        ),
        grid_spec=pltpu.PrefetchScalarGridSpec(
            num_scalar_prefetch=0,
            grid=(N, S, T_s),
            in_specs=[
                pl.BlockSpec((None, C, rt, _LANES),
                             lambda n, s, i: (n, 0, s * T_s + i, 0)),
                pl.BlockSpec((None, C, rt, _LANES),
                             lambda n, s, i: (n, 0, s * T_s + i, 0)),
            ],
            out_specs=[
                pl.BlockSpec((None, None, 1, _LANES), lambda n, s, i: (n, s, 0, 0)),
                pl.BlockSpec((None, None, C, _LANES), lambda n, s, i: (n, s, 0, 0)),
                pl.BlockSpec((None, None, C, _LANES), lambda n, s, i: (n, s, 0, 0)),
                pl.BlockSpec((None, None, C, _LANES), lambda n, s, i: (n, s, 0, 0)),
            ],
            scratch_shapes=[
                pltpu.VMEM((acc_rows, _LANES), jnp.float32),        # sum_c m*logsm
                pltpu.VMEM((C, acc_rows, _LANES), jnp.float32),     # sum(pred*mask)
                pltpu.VMEM((C, acc_rows, _LANES), jnp.float32),     # sum(pred^2)
                pltpu.VMEM((C, acc_rows, _LANES), jnp.float32),     # sum(mask^2)
            ],
        ),
        compiler_params=pltpu.CompilerParams(
            dimension_semantics=("parallel", "parallel", "arbitrary"),
            vmem_limit_bytes=48 * 1024 * 1024,
        ),
    )(pred4, mask4)

    # Tiny JAX epilogue: combine per-(sample, split) lane-wise partials.
    ce = -jnp.sum(ce_p) / jnp.float32(N * HW)
    inter = jnp.sum(inter_p, axis=(0, 1, 3))   # (C,)
    psq = jnp.sum(psq_p, axis=(0, 1, 3))
    msq = jnp.sum(msq_p, axis=(0, 1, 3))
    dice = (2.0 * inter + eps) / (psq + msq + eps)
    dice_loss = jnp.sum(1.0 - dice)
    return 0.5 * dice_loss / C + 0.5 * ce


def _reference_loss(prediction, mask, eps=1e-15):
    """Pure-JAX reference mirroring the PyTorch module."""
    logsm = jax.nn.log_softmax(prediction, axis=1)
    ce = jnp.mean(jnp.sum(-mask * logsm, axis=1))
    sm = jax.nn.softmax(prediction, axis=1)
    num_classes = prediction.shape[1]
    dice_loss = 0.0
    for i in range(num_classes):
        p = sm[:, i]
        m = mask[:, i]
        inter = jnp.sum(p * m)
        union = jnp.sum(p * p) + jnp.sum(m * m)
        dice_loss += 1.0 - (2.0 * inter + eps) / (union + eps)
    return 0.5 * dice_loss / num_classes + 0.5 * ce


if __name__ == "__main__":
    root = jax.random.PRNGKey(0)

    def run_case(case_id, n, c, h, w, **kw):
        k1, k2 = jax.random.split(jax.random.fold_in(root, case_id))
        pred = jax.random.normal(k1, (n, c, h, w), dtype=jnp.float32)
        labels = jax.random.randint(k2, (n, h, w), 0, c)
        msk = jax.nn.one_hot(labels, c, axis=1, dtype=jnp.float32)  # (n, c, h, w)
        out = jax.block_until_ready(transunet_loss(pred, msk, **kw))
        ref = jax.block_until_ready(_reference_loss(pred, msk))
        assert jnp.allclose(out, ref, rtol=1e-5, atol=1e-5), (case_id, out, ref)
        return out

    # Single tile, HW % 128 == 0 -> mask/clamp path compiled out entirely.
    run_case(0, 2, 4, 16, 16)
    # Multi-step accumulation + pre-reduce (groups=2) + partial edge-tile mask.
    run_case(1, 2, 4, 48, 48, rows_per_step=16)
    # Odd N -> extra row-split parallel axis (v7x megacore) + multi-step acc.
    run_case(2, 1, 4, 64, 64, rows_per_step=8)
    # HW not a multiple of 128 -> lane padding + validity mask.
    run_case(3, 2, 4, 15, 15)

    print("KERNEL_OK")
</pallas_src>

<mosaic_0001>
module attributes {stable_mosaic.version = 11 : i64} {
  func.func @_loss_kernel(%arg0: i32, %arg1: i32, %arg2: i32, %arg3: memref<1x4x2x128xf32, #tpu.memory_space<vmem>>, %arg4: memref<1x4x2x128xf32, #tpu.memory_space<vmem>>, %arg5: memref<1x1x1x128xf32, #tpu.memory_space<vmem>>, %arg6: memref<1x1x4x128xf32, #tpu.memory_space<vmem>>, %arg7: memref<1x1x4x128xf32, #tpu.memory_space<vmem>>, %arg8: memref<1x1x4x128xf32, #tpu.memory_space<vmem>>, %arg9: memref<2x128xf32, #tpu.memory_space<vmem>>, %arg10: memref<4x2x128xf32, #tpu.memory_space<vmem>>, %arg11: memref<4x2x128xf32, #tpu.memory_space<vmem>>, %arg12: memref<4x2x128xf32, #tpu.memory_space<vmem>>) attributes {dimension_semantics = [#tpu.dimension_semantics<parallel>, #tpu.dimension_semantics<parallel>, #tpu.dimension_semantics<arbitrary>], iteration_bounds = array<i64: 2, 1, 1>, scalar_prefetch = 0 : i64, scratch_operands = 4 : i64, tpu.core_type = #tpu.core_type<tc>, window_params = [{transform_indices = @transform_0, window_bounds = array<i64: 1, 4, 2, 128>}, {transform_indices = @transform_1, window_bounds = array<i64: 1, 4, 2, 128>}, {transform_indices = @transform_2, window_bounds = array<i64: 1, 1, 1, 128>}, {transform_indices = @transform_3, window_bounds = array<i64: 1, 1, 4, 128>}, {transform_indices = @transform_4, window_bounds = array<i64: 1, 1, 4, 128>}, {transform_indices = @transform_5, window_bounds = array<i64: 1, 1, 4, 128>}]} {
    %c0_i32 = arith.constant 0 : i32
    %0 = arith.cmpi eq, %arg2, %c0_i32 : i32
    %1 = arith.extui %0 : i1 to i32
    %c0_i32_0 = arith.constant 0 : i32
    %2 = arith.cmpi ne, %1, %c0_i32_0 : i32
    scf.if %2 {
      %cst_35 = arith.constant 0.000000e+00 : f32
      %44 = vector.broadcast %cst_35 : f32 to vector<2x128xf32>
      %c0_36 = arith.constant 0 : index
      %c0_37 = arith.constant 0 : index
      %45 = vector.load %arg9[%c0_36, %c0_37] : memref<2x128xf32, #tpu.memory_space<vmem>>, vector<2x128xf32>
      tpu.vector_store %arg9[%c0_36, %c0_37], %44 {strides = array<i32>} : memref<2x128xf32, #tpu.memory_space<vmem>>, vector<2x128xf32>,
      %cst_38 = arith.constant 0.000000e+00 : f32
      %46 = vector.broadcast %cst_38 : f32 to vector<4x2x128xf32>
      %c0_39 = arith.constant 0 : index
      %c0_40 = arith.constant 0 : index
      %c0_41 = arith.constant 0 : index
      %47 = vector.load %arg10[%c0_39, %c0_40, %c0_41] : memref<4x2x128xf32, #tpu.memory_space<vmem>>, vector<4x2x128xf32>
      tpu.vector_store %arg10[%c0_39, %c0_40, %c0_41], %46 {strides = array<i32>} : memref<4x2x128xf32, #tpu.memory_space<vmem>>, vector<4x2x128xf32>,
      %cst_42 = arith.constant 0.000000e+00 : f32
      %48 = vector.broadcast %cst_42 : f32 to vector<4x2x128xf32>
      %c0_43 = arith.constant 0 : index
      %c0_44 = arith.constant 0 : index
      %c0_45 = arith.constant 0 : index
      %49 = vector.load %arg11[%c0_43, %c0_44, %c0_45] : memref<4x2x128xf32, #tpu.memory_space<vmem>>, vector<4x2x128xf32>
      tpu.vector_store %arg11[%c0_43, %c0_44, %c0_45], %48 {strides = array<i32>} : memref<4x2x128xf32, #tpu.memory_space<vmem>>, vector<4x2x128xf32>,
      %cst_46 = arith.constant 0.000000e+00 : f32
      %50 = vector.broadcast %cst_46 : f32 to vector<4x2x128xf32>
      %c0_47 = arith.constant 0 : index
      %c0_48 = arith.constant 0 : index
      %c0_49 = arith.constant 0 : index
      %51 = vector.load %arg12[%c0_47, %c0_48, %c0_49] : memref<4x2x128xf32, #tpu.memory_space<vmem>>, vector<4x2x128xf32>
      tpu.vector_store %arg12[%c0_47, %c0_48, %c0_49], %50 {strides = array<i32>} : memref<4x2x128xf32, #tpu.memory_space<vmem>>, vector<4x2x128xf32>,
    } else {
    }
    %c0 = arith.constant 0 : index
    %c0_1 = arith.constant 0 : index
    %c0_2 = arith.constant 0 : index
    %c0_3 = arith.constant 0 : index
    %3 = vector.load %arg3[%c0, %c0_1, %c0_2, %c0_3] : memref<1x4x2x128xf32, #tpu.memory_space<vmem>>, vector<1x4x2x128xf32>
    %4 = vector.shape_cast %3 : vector<1x4x2x128xf32> to vector<4x2x128xf32>
    %c0_4 = arith.constant 0 : index
    %c0_5 = arith.constant 0 : index
    %c0_6 = arith.constant 0 : index
    %c0_7 = arith.constant 0 : index
    %5 = vector.load %arg4[%c0_4, %c0_5, %c0_6, %c0_7] : memref<1x4x2x128xf32, #tpu.memory_space<vmem>>, vector<1x4x2x128xf32>
    %6 = vector.shape_cast %5 : vector<1x4x2x128xf32> to vector<4x2x128xf32>
    %cst = arith.constant dense<0xFF800000> : vector<2x128xf32>
    %7 = vector.multi_reduction <maximumf>, %4, %cst [0] : vector<4x2x128xf32> to vector<2x128xf32>
    %8 = vector.shape_cast %7 : vector<2x128xf32> to vector<1x2x128xf32>
    %9 = vector.broadcast %8 : vector<1x2x128xf32> to vector<4x2x128xf32>
    %10 = arith.subf %4, %9 : vector<4x2x128xf32>
    %11 = math.exp %10 : vector<4x2x128xf32>
    %cst_8 = arith.constant dense<0.000000e+00> : vector<2x128xf32>
    %12 = vector.multi_reduction <add>, %11, %cst_8 [0] : vector<4x2x128xf32> to vector<2x128xf32>
    %13 = vector.shape_cast %12 : vector<2x128xf32> to vector<1x2x128xf32>
    %14 = tpu.reciprocal %13 {approx = true} : vector<1x2x128xf32> -> vector<1x2x128xf32>
    %15 = arith.mulf %13, %14 : vector<1x2x128xf32>
    %cst_9 = arith.constant 2.000000e+00 : f32
    %16 = vector.broadcast %cst_9 : f32 to vector<1x2x128xf32>
    %17 = arith.subf %16, %15 : vector<1x2x128xf32>
    %18 = arith.mulf %14, %17 : vector<1x2x128xf32>
    %19 = vector.broadcast %18 : vector<1x2x128xf32> to vector<4x2x128xf32>
    %20 = arith.mulf %11, %19 : vector<4x2x128xf32>
    %21 = math.log %13 : vector<1x2x128xf32>
    %22 = vector.broadcast %21 : vector<1x2x128xf32> to vector<4x2x128xf32>
    %23 = arith.subf %10, %22 : vector<4x2x128xf32>
    %24 = arith.mulf %6, %23 : vector<4x2x128xf32>
    %cst_10 = arith.constant dense<0.000000e+00> : vector<2x128xf32>
    %25 = vector.multi_reduction <add>, %24, %cst_10 [0] : vector<4x2x128xf32> to vector<2x128xf32>
    %26 = arith.mulf %20, %6 : vector<4x2x128xf32>
    %27 = arith.mulf %20, %20 : vector<4x2x128xf32>
    %28 = arith.mulf %6, %6 : vector<4x2x128xf32>
    %c0_11 = arith.constant 0 : index
    %c0_12 = arith.constant 0 : index
    %29 = vector.load %arg9[%c0_11, %c0_12] : memref<2x128xf32, #tpu.memory_space<vmem>>, vector<2x128xf32>
    %30 = arith.addf %29, %25 : vector<2x128xf32>
    %c0_13 = arith.constant 0 : index
    %c0_14 = arith.constant 0 : index
    %31 = vector.load %arg9[%c0_13, %c0_14] : memref<2x128xf32, #tpu.memory_space<vmem>>, vector<2x128xf32>
    tpu.vector_store %arg9[%c0_13, %c0_14], %30 {strides = array<i32>} : memref<2x128xf32, #tpu.memory_space<vmem>>, vector<2x128xf32>,
    %c0_15 = arith.constant 0 : index
    %c0_16 = arith.constant 0 : index
    %c0_17 = arith.constant 0 : index
    %32 = vector.load %arg10[%c0_15, %c0_16, %c0_17] : memref<4x2x128xf32, #tpu.memory_space<vmem>>, vector<4x2x128xf32>
    %33 = arith.addf %32, %26 : vector<4x2x128xf32>
    %c0_18 = arith.constant 0 : index
    %c0_19 = arith.constant 0 : index
    %c0_20 = arith.constant 0 : index
    %34 = vector.load %arg10[%c0_18, %c0_19, %c0_20] : memref<4x2x128xf32, #tpu.memory_space<vmem>>, vector<4x2x128xf32>
    tpu.vector_store %arg10[%c0_18, %c0_19, %c0_20], %33 {strides = array<i32>} : memref<4x2x128xf32, #tpu.memory_space<vmem>>, vector<4x2x128xf32>,
    %c0_21 = arith.constant 0 : index
    %c0_22 = arith.constant 0 : index
    %c0_23 = arith.constant 0 : index
    %35 = vector.load %arg11[%c0_21, %c0_22, %c0_23] : memref<4x2x128xf32, #tpu.memory_space<vmem>>, vector<4x2x128xf32>
    %36 = arith.addf %35, %27 : vector<4x2x128xf32>
    %c0_24 = arith.constant 0 : index
    %c0_25 = arith.constant 0 : index
    %c0_26 = arith.constant 0 : index
    %37 = vector.load %arg11[%c0_24, %c0_25, %c0_26] : memref<4x2x128xf32, #tpu.memory_space<vmem>>, vector<4x2x128xf32>
    tpu.vector_store %arg11[%c0_24, %c0_25, %c0_26], %36 {strides = array<i32>} : memref<4x2x128xf32, #tpu.memory_space<vmem>>, vector<4x2x128xf32>,
    %c0_27 = arith.constant 0 : index
    %c0_28 = arith.constant 0 : index
    %c0_29 = arith.constant 0 : index
    %38 = vector.load %arg12[%c0_27, %c0_28, %c0_29] : memref<4x2x128xf32, #tpu.memory_space<vmem>>, vector<4x2x128xf32>
    %39 = arith.addf %38, %28 : vector<4x2x128xf32>
    %c0_30 = arith.constant 0 : index
    %c0_31 = arith.constant 0 : index
    %c0_32 = arith.constant 0 : index
    %40 = vector.load %arg12[%c0_30, %c0_31, %c0_32] : memref<4x2x128xf32, #tpu.memory_space<vmem>>, vector<4x2x128xf32>
    tpu.vector_store %arg12[%c0_30, %c0_31, %c0_32], %39 {strides = array<i32>} : memref<4x2x128xf32, #tpu.memory_space<vmem>>, vector<4x2x128xf32>,
    %c0_i32_33 = arith.constant 0 : i32
    %41 = arith.cmpi eq, %arg2, %c0_i32_33 : i32
    %42 = arith.extui %41 : i1 to i32
    %c0_i32_34 = arith.constant 0 : i32
    %43 = arith.cmpi ne, %42, %c0_i32_34 : i32
    scf.if %43 {
      %c0_35 = arith.constant 0 : index
      %c0_36 = arith.constant 0 : index
      %44 = vector.load %arg9[%c0_35, %c0_36] : memref<2x128xf32, #tpu.memory_space<vmem>>, vector<2x128xf32>
      %cst_37 = arith.constant dense<0.000000e+00> : vector<128xf32>
      %45 = vector.multi_reduction <add>, %44, %cst_37 [0] : vector<2x128xf32> to vector<128xf32>
      %46 = vector.shape_cast %45 : vector<128xf32> to vector<1x128xf32>
      %c0_38 = arith.constant 0 : index
      %c0_39 = arith.constant 0 : index
      %c0_40 = arith.constant 0 : index
      %c0_41 = arith.constant 0 : index
      %47 = vector.load %arg5[%c0_38, %c0_39, %c0_40, %c0_41] : memref<1x1x1x128xf32, #tpu.memory_space<vmem>>, vector<1x1x1x128xf32>
      %48 = vector.shape_cast %47 : vector<1x1x1x128xf32> to vector<1x128xf32>
      %49 = vector.shape_cast %46 : vector<1x128xf32> to vector<1x1x1x128xf32>
      tpu.vector_store %arg5[%c0_38, %c0_39, %c0_40, %c0_41], %49 {strides = array<i32>} : memref<1x1x1x128xf32, #tpu.memory_space<vmem>>, vector<1x1x1x128xf32>,
      %c0_42 = arith.constant 0 : index
      %c0_43 = arith.constant 0 : index
      %c0_44 = arith.constant 0 : index
      %50 = vector.load %arg10[%c0_42, %c0_43, %c0_44] : memref<4x2x128xf32, #tpu.memory_space<vmem>>, vector<4x2x128xf32>
      %cst_45 = arith.constant dense<0.000000e+00> : vector<4x128xf32>
      %51 = vector.multi_reduction <add>, %50, %cst_45 [1] : vector<4x2x128xf32> to vector<4x128xf32>
      %c0_46 = arith.constant 0 : index
      %c0_47 = arith.constant 0 : index
      %c0_48 = arith.constant 0 : index
      %c0_49 = arith.constant 0 : index
      %52 = vector.load %arg6[%c0_46, %c0_47, %c0_48, %c0_49] : memref<1x1x4x128xf32, #tpu.memory_space<vmem>>, vector<1x1x4x128xf32>
      %53 = vector.shape_cast %52 : vector<1x1x4x128xf32> to vector<4x128xf32>
      %54 = vector.shape_cast %51 : vector<4x128xf32> to vector<1x1x4x128xf32>
      tpu.vector_store %arg6[%c0_46, %c0_47, %c0_48, %c0_49], %54 {strides = array<i32>} : memref<1x1x4x128xf32, #tpu.memory_space<vmem>>, vector<1x1x4x128xf32>,
      %c0_50 = arith.constant 0 : index
      %c0_51 = arith.constant 0 : index
      %c0_52 = arith.constant 0 : index
      %55 = vector.load %arg11[%c0_50, %c0_51, %c0_52] : memref<4x2x128xf32, #tpu.memory_space<vmem>>, vector<4x2x128xf32>
      %cst_53 = arith.constant dense<0.000000e+00> : vector<4x128xf32>
      %56 = vector.multi_reduction <add>, %55, %cst_53 [1] : vector<4x2x128xf32> to vector<4x128xf32>
      %c0_54 = arith.constant 0 : index
      %c0_55 = arith.constant 0 : index
      %c0_56 = arith.constant 0 : index
      %c0_57 = arith.constant 0 : index
      %57 = vector.load %arg7[%c0_54, %c0_55, %c0_56, %c0_57] : memref<1x1x4x128xf32, #tpu.memory_space<vmem>>, vector<1x1x4x128xf32>
      %58 = vector.shape_cast %57 : vector<1x1x4x128xf32> to vector<4x128xf32>
      %59 = vector.shape_cast %56 : vector<4x128xf32> to vector<1x1x4x128xf32>
      tpu.vector_store %arg7[%c0_54, %c0_55, %c0_56, %c0_57], %59 {strides = array<i32>} : memref<1x1x4x128xf32, #tpu.memory_space<vmem>>, vector<1x1x4x128xf32>,
      %c0_58 = arith.constant 0 : index
      %c0_59 = arith.constant 0 : index
      %c0_60 = arith.constant 0 : index
      %60 = vector.load %arg12[%c0_58, %c0_59, %c0_60] : memref<4x2x128xf32, #tpu.memory_space<vmem>>, vector<4x2x128xf32>
      %cst_61 = arith.constant dense<0.000000e+00> : vector<4x128xf32>
      %61 = vector.multi_reduction <add>, %60, %cst_61 [1] : vector<4x2x128xf32> to vector<4x128xf32>
      %c0_62 = arith.constant 0 : index
      %c0_63 = arith.constant 0 : index
      %c0_64 = arith.constant 0 : index
      %c0_65 = arith.constant 0 : index
      %62 = vector.load %arg8[%c0_62, %c0_63, %c0_64, %c0_65] : memref<1x1x4x128xf32, #tpu.memory_space<vmem>>, vector<1x1x4x128xf32>
      %63 = vector.shape_cast %62 : vector<1x1x4x128xf32> to vector<4x128xf32>
      %64 = vector.shape_cast %61 : vector<4x128xf32> to vector<1x1x4x128xf32>
      tpu.vector_store %arg8[%c0_62, %c0_63, %c0_64, %c0_65], %64 {strides = array<i32>} : memref<1x1x4x128xf32, #tpu.memory_space<vmem>>, vector<1x1x4x128xf32>,
    } else {
    }
    return
  }
  func.func @transform_0(%arg0: i32, %arg1: i32, %arg2: i32) -> (i32, i32, i32, i32) {
    %c1_i32 = arith.constant 1 : i32
    %0 = arith.muli %arg1, %c1_i32 : i32
    %1 = arith.addi %0, %arg2 : i32
    %c0_i32 = arith.constant 0 : i32
    %c0_i32_0 = arith.constant 0 : i32
    %c0_i32_1 = arith.constant 0 : i32
    return %arg0, %c0_i32, %1, %c0_i32_0 : i32, i32, i32, i32
  }
  func.func @transform_1(%arg0: i32, %arg1: i32, %arg2: i32) -> (i32, i32, i32, i32) {
    %c1_i32 = arith.constant 1 : i32
    %0 = arith.muli %arg1, %c1_i32 : i32
    %1 = arith.addi %0, %arg2 : i32
    %c0_i32 = arith.constant 0 : i32
    %c0_i32_0 = arith.constant 0 : i32
    %c0_i32_1 = arith.constant 0 : i32
    return %arg0, %c0_i32, %1, %c0_i32_0 : i32, i32, i32, i32
  }
  func.func @transform_2(%arg0: i32, %arg1: i32, %arg2: i32) -> (i32, i32, i32, i32) {
    %c0_i32 = arith.constant 0 : i32
    %c0_i32_0 = arith.constant 0 : i32
    %c0_i32_1 = arith.constant 0 : i32
    return %arg0, %arg1, %c0_i32, %c0_i32_0 : i32, i32, i32, i32
  }
  func.func @transform_3(%arg0: i32, %arg1: i32, %arg2: i32) -> (i32, i32, i32, i32) {
    %c0_i32 = arith.constant 0 : i32
    %c0_i32_0 = arith.constant 0 : i32
    %c0_i32_1 = arith.constant 0 : i32
    return %arg0, %arg1, %c0_i32, %c0_i32_0 : i32, i32, i32, i32
  }
  func.func @transform_4(%arg0: i32, %arg1: i32, %arg2: i32) -> (i32, i32, i32, i32) {
    %c0_i32 = arith.constant 0 : i32
    %c0_i32_0 = arith.constant 0 : i32
    %c0_i32_1 = arith.constant 0 : i32
    return %arg0, %arg1, %c0_i32, %c0_i32_0 : i32, i32, i32, i32
  }
  func.func @transform_5(%arg0: i32, %arg1: i32, %arg2: i32) -> (i32, i32, i32, i32) {
    %c0_i32 = arith.constant 0 : i32
    %c0_i32_0 = arith.constant 0 : i32
    %c0_i32_1 = arith.constant 0 : i32
    return %arg0, %arg1, %c0_i32, %c0_i32_0 : i32, i32, i32, i32
  }
}

</mosaic_0001>

<llo_original>
// kernel: tpu_custom_call.1
$region0: #{tpu_custom_call.1}
  #allocation0 [shape = 'u32[]', space=smem, size = 0x4, offset = 0x4, fixed_abs, tag = 'smem constant byte address 0x4 - core index']
  #allocation1 [shape = 'u32[144,128]{1,0:T(1,128)}', space=vmem, size = 0x12000, scoped, tag = 'internal scratch']
  #allocation2 [shape = 'f32[2,128]{1,0:T(2,128)}', space=vmem, size = 0x400, scoped, tag = 'scratch operand']
  #allocation3 [shape = 'f32[4,2,128]{2,1,0:T(2,128)}', space=vmem, size = 0x1000, scoped, tag = 'scratch operand']
  #allocation4 [shape = 'f32[4,2,128]{2,1,0:T(2,128)}', space=vmem, size = 0x1000, scoped, tag = 'scratch operand']
  #allocation5 [shape = 'f32[4,2,128]{2,1,0:T(2,128)}', space=vmem, size = 0x1000, scoped, tag = 'scratch operand']
  %s0 = inlined_call_operand.hbm [shape: f32[2,4,2,128], index: 0, kind: input, shape index: {}]
  %s1 = inlined_call_operand.hbm [shape: f32[2,4,2,128], index: 1, kind: input, shape index: {}]
  %s2 = inlined_call_operand.hbm [shape: f32[2,1,1,128], index: 2, kind: output, shape index: {0}]
  %s3 = inlined_call_operand.hbm [shape: f32[2,1,4,128], index: 3, kind: output, shape index: {1}]
  %s4 = inlined_call_operand.hbm [shape: f32[2,1,4,128], index: 4, kind: output, shape index: {2}]
  %s5 = inlined_call_operand.hbm [shape: f32[2,1,4,128], index: 5, kind: output, shape index: {3}]
  %6 = xla_tuple %s2, %s3, %s4, %s5
  %s7 = sld [smem:[#allocation0]]
  $region81: #{tpu_custom_call.1} parent=0
    _
  %s9 = ssub.s32 1, %s7
  %s10 = scalar_select 0, %s9, %s7
  $region1: #{tpu_custom_call.1} parent=0
    #allocation6 [shape = 'u8[8192]{0}', space=vmem, size = 0x2000, scoped, tag = 'input window, operand 0']
    #allocation7 [shape = 's32[2]{0}', space=sflag, size = 0x8, scoped, tag = 'scoped memory for tpu_custom_call.1']
    #allocation8 [shape = 's32[2]{0}', space=sflag, size = 0x8, scoped, tag = 'scoped memory for tpu_custom_call.1']
    #allocation9 [shape = 'u8[8192]{0}', space=vmem, size = 0x2000, scoped, tag = 'input window, operand 1']
    #allocation10 [shape = 's32[2]{0}', space=sflag, size = 0x8, scoped, tag = 'scoped memory for tpu_custom_call.1']
    #allocation11 [shape = 'u8[1024]{0}', space=vmem, size = 0x400, scoped, tag = 'output window, operand 0']
    #allocation12 [shape = 'u8[4096]{0}', space=vmem, size = 0x1000, scoped, tag = 'output window, operand 1']
    #allocation13 [shape = 's32[2]{0}', space=sflag, size = 0x8, scoped, tag = 'scoped memory for tpu_custom_call.1']
    #allocation14 [shape = 'u8[4096]{0}', space=vmem, size = 0x1000, scoped, tag = 'output window, operand 2']
    #allocation15 [shape = 'u8[4096]{0}', space=vmem, size = 0x1000, scoped, tag = 'output window, operand 3']
    #allocation16 [shape = 's32[2]{0}', space=sflag, size = 0x8, scoped, tag = 'scoped memory for tpu_custom_call.1']
    %11 = vsyncpa [#allocation7], 0
    %s12 = scalar_lea.sflag [#allocation7], 1
    %13 = vsyncpa %s12, 0
    %14 = vsyncpa [#allocation10], 0
    %s15 = scalar_lea.sflag [#allocation10], 1
    %16 = vsyncpa %s15, 0
    %17 = vsyncpa [#allocation8], 0
    %s18 = scalar_lea.sflag [#allocation8], 1
    %19 = vsyncpa %s18, 0
    %20 = vsyncpa [#allocation13], 0
    %s21 = scalar_lea.sflag [#allocation13], 1
    %22 = vsyncpa %s21, 0
    %23 = vsyncpa [#allocation16], 0
    %s24 = scalar_lea.sflag [#allocation16], 1
    %25 = vsyncpa %s24, 0
    loop: start=0, step=1, limit=4
    $region2: #{tpu_custom_call.1} parent=1 // loop_pre_header
      _
    $region3: #{tpu_custom_call.1} parent=1 // loop_header
      %s27 = sphi 0, %s31
      %p28 = scmp.ge.s32.totalorder %s27, 4
      %s34 = sphi 0, %s53
      %s35 = sphi 0, %s49
      %s36 = sphi 0, %s45
      %s37 = sphi 0, %s34
      %s38 = sphi 0, %s35
      %s39 = sphi 0, %s36
      %s40 = sphi 0, %s37
      %s41 = sphi 0, %s38
      %s42 = sphi 0, %s39
      %s60 = sphi 0, %s62
      %s63 = sphi 0, %s60
      %s64 = sphi 0, %s63
      %s80 = sphi 0, %s64
      %s90 = sphi 0, %s92
      %s93 = sphi 0, %s90
      %s94 = sphi 0, %s93
      %s110 = sphi 0, %s94
      %s118 = sphi 0, %s120
      %s121 = sphi 0, %s118
      %s122 = sphi 0, %s121
      %s138 = sphi 0, %s122
      %s146 = sphi 0, %s148
      %s149 = sphi 0, %s146
      %s150 = sphi 0, %s149
      %s166 = sphi 0, %s150
      %s174 = sphi 0, %s176
      %s177 = sphi 0, %s174
      %s178 = sphi 0, %s177
      %s194 = sphi 0, %s178
      %s202 = sphi 0, %s204
      %s205 = sphi 0, %s202
      %s206 = sphi 0, %s205
      %s222 = sphi 0, %s206
    $region4: #{tpu_custom_call.1} parent=1 // loop_header_branch
      %30 = sbr.rel (%p28) target = $region8
    $region5: #{tpu_custom_call.1} parent=1 // loop_body
      %s32 = ssub.s32 %s27, 1
      %s33 = ssub.s32 %s27, 2
      %s43 = sadd.s32 1, %s36
      %p44 = scmp.ge.s32.totalorder %s43, 1
      %s45 = scalar_select %p44, 0, %s43
      %s46 = sadd.s32 1, %s35
      %s47 = scalar_select %p44, %s46, %s35
      %p48 = scmp.ge.s32.totalorder %s47, 1
      %s49 = scalar_select %p48, 0, %s47
      %s50 = sadd.s32 1, %s34
      %s51 = scalar_select %p48, %s50, %s34
      %p52 = scmp.ge.s32.totalorder %s51, 2
      %s53 = scalar_select %p52, 0, %s51
      %s54 = sadd.s32 %s35, %s36
      %s55 = sadd.s32 %s49, %s45
      %s56 = ssub.s32 %s34, %s53
      %s57 = ssub.s32 %s54, %s55
      %s58 = sor.u32 %s56, %s57
      %p59 = scmp.eq.s32.totalorder %s58, 0
      %s61 = sadd.s32 %s60, 1
      %s62 = scalar_select %p59, %s60, %s61
      %p65 = pneg %p59
      %p66 = scmp.eq.s32.totalorder %s27, 1
      %p67 = por %p65, %p66
      %p68 = scmp.ne.s32.totalorder %s60, %s63
      %p69 = scmp.eq.s32.totalorder %s27, 0
      %p70 = por %p68, %p69
      %p71 = scmp.ne.s32.totalorder %s60, %s63
      %p72 = scmp.eq.s32.totalorder %s32, 1
      %p73 = por %p71, %p72
      %p74 = scmp.ne.s32.totalorder %s63, %s64
      %p75 = scmp.eq.s32.totalorder %s32, 0
      %p76 = por %p74, %p75
      %p77 = scmp.ne.s32.totalorder %s63, %s64
      %p78 = scmp.eq.s32.totalorder %s33, 1
      %p79 = por %p77, %p78
      %p81 = scmp.ne.s32.totalorder %s64, %s80
      %p82 = scmp.eq.s32.totalorder %s33, 0
      %p83 = por %p81, %p82
      %s84 = sadd.s32 %s35, %s36
      %s85 = sadd.s32 %s49, %s45
      %s86 = ssub.s32 %s34, %s53
      %s87 = ssub.s32 %s84, %s85
      %s88 = sor.u32 %s86, %s87
      %p89 = scmp.eq.s32.totalorder %s88, 0
      %s91 = sadd.s32 %s90, 1
      %s92 = scalar_select %p89, %s90, %s91
      %p95 = pneg %p89
      %p96 = scmp.eq.s32.totalorder %s27, 1
      %p97 = por %p95, %p96
      %p98 = scmp.ne.s32.totalorder %s90, %s93
      %p99 = scmp.eq.s32.totalorder %s27, 0
      %p100 = por %p98, %p99
      %p101 = scmp.ne.s32.totalorder %s90, %s93
      %p102 = scmp.eq.s32.totalorder %s32, 1
      %p103 = por %p101, %p102
      %p104 = scmp.ne.s32.totalorder %s93, %s94
      %p105 = scmp.eq.s32.totalorder %s32, 0
      %p106 = por %p104, %p105
      %p107 = scmp.ne.s32.totalorder %s93, %s94
      %p108 = scmp.eq.s32.totalorder %s33, 1
      %p109 = por %p107, %p108
      %p111 = scmp.ne.s32.totalorder %s94, %s110
      %p112 = scmp.eq.s32.totalorder %s33, 0
      %p113 = por %p111, %p112
      %s114 = ssub.s32 %s34, %s53
      %s115 = ssub.s32 %s35, %s49
      %s116 = sor.u32 %s114, %s115
      %p117 = scmp.eq.s32.totalorder %s116, 0
      %s119 = sadd.s32 %s118, 1
      %s120 = scalar_select %p117, %s118, %s119
      %p123 = pneg %p117
      %p124 = scmp.eq.s32.totalorder %s27, 1
      %p125 = por %p123, %p124
      %p126 = scmp.ne.s32.totalorder %s118, %s121
      %p127 = scmp.eq.s32.totalorder %s27, 0
      %p128 = por %p126, %p127
      %p129 = scmp.ne.s32.totalorder %s118, %s121
      %p130 = scmp.eq.s32.totalorder %s32, 1
      %p131 = por %p129, %p130
      %p132 = scmp.ne.s32.totalorder %s121, %s122
      %p133 = scmp.eq.s32.totalorder %s32, 0
      %p134 = por %p132, %p133
      %p135 = scmp.ne.s32.totalorder %s121, %s122
      %p136 = scmp.eq.s32.totalorder %s33, 1
      %p137 = por %p135, %p136
      %p139 = scmp.ne.s32.totalorder %s122, %s138
      %p140 = scmp.eq.s32.totalorder %s33, 0
      %p141 = por %p139, %p140
      %s142 = ssub.s32 %s34, %s53
      %s143 = ssub.s32 %s35, %s49
      %s144 = sor.u32 %s142, %s143
      %p145 = scmp.eq.s32.totalorder %s144, 0
      %s147 = sadd.s32 %s146, 1
      %s148 = scalar_select %p145, %s146, %s147
      %p151 = pneg %p145
      %p152 = scmp.eq.s32.totalorder %s27, 1
      %p153 = por %p151, %p152
      %p154 = scmp.ne.s32.totalorder %s146, %s149
      %p155 = scmp.eq.s32.totalorder %s27, 0
      %p156 = por %p154, %p155
      %p157 = scmp.ne.s32.totalorder %s146, %s149
      %p158 = scmp.eq.s32.totalorder %s32, 1
      %p159 = por %p157, %p158
      %p160 = scmp.ne.s32.totalorder %s149, %s150
      %p161 = scmp.eq.s32.totalorder %s32, 0
      %p162 = por %p160, %p161
      %p163 = scmp.ne.s32.totalorder %s149, %s150
      %p164 = scmp.eq.s32.totalorder %s33, 1
      %p165 = por %p163, %p164
      %p167 = scmp.ne.s32.totalorder %s150, %s166
      %p168 = scmp.eq.s32.totalorder %s33, 0
      %p169 = por %p167, %p168
      %s170 = ssub.s32 %s34, %s53
      %s171 = ssub.s32 %s35, %s49
      %s172 = sor.u32 %s170, %s171
      %p173 = scmp.eq.s32.totalorder %s172, 0
      %s175 = sadd.s32 %s174, 1
      %s176 = scalar_select %p173, %s174, %s175
      %p179 = pneg %p173
      %p180 = scmp.eq.s32.totalorder %s27, 1
      %p181 = por %p179, %p180
      %p182 = scmp.ne.s32.totalorder %s174, %s177
      %p183 = scmp.eq.s32.totalorder %s27, 0
      %p184 = por %p182, %p183
      %p185 = scmp.ne.s32.totalorder %s174, %s177
      %p186 = scmp.eq.s32.totalorder %s32, 1
      %p187 = por %p185, %p186
      %p188 = scmp.ne.s32.totalorder %s177, %s178
      %p189 = scmp.eq.s32.totalorder %s32, 0
      %p190 = por %p188, %p189
      %p191 = scmp.ne.s32.totalorder %s177, %s178
      %p192 = scmp.eq.s32.totalorder %s33, 1
      %p193 = por %p191, %p192
      %p195 = scmp.ne.s32.totalorder %s178, %s194
      %p196 = scmp.eq.s32.totalorder %s33, 0
      %p197 = por %p195, %p196
      %s198 = ssub.s32 %s34, %s53
      %s199 = ssub.s32 %s35, %s49
      %s200 = sor.u32 %s198, %s199
      %p201 = scmp.eq.s32.totalorder %s200, 0
      %s203 = sadd.s32 %s202, 1
      %s204 = scalar_select %p201, %s202, %s203
      %p207 = pneg %p201
      %p208 = scmp.eq.s32.totalorder %s27, 1
      %p209 = por %p207, %p208
      %p210 = scmp.ne.s32.totalorder %s202, %s205
      %p211 = scmp.eq.s32.totalorder %s27, 0
      %p212 = por %p210, %p211
      %p213 = scmp.ne.s32.totalorder %s202, %s205
      %p214 = scmp.eq.s32.totalorder %s32, 1
      %p215 = por %p213, %p214
      %p216 = scmp.ne.s32.totalorder %s205, %s206
      %p217 = scmp.eq.s32.totalorder %s32, 0
      %p218 = por %p216, %p217
      %p219 = scmp.ne.s32.totalorder %s205, %s206
      %p220 = scmp.eq.s32.totalorder %s33, 1
      %p221 = por %p219, %p220
      %p223 = scmp.ne.s32.totalorder %s206, %s222
      %p224 = scmp.eq.s32.totalorder %s33, 0
      %p225 = por %p223, %p224
      %p226 = scmp.le.s32.totalorder 1, %s27
      %p227 = scmp.lt.s32.totalorder %s27, 3
      %p228 = pnand %p226, %p227
      %p229 = pneg %p228
      // Predicated region
      $region9: #{tpu_custom_call.1} parent=5 // pred_check
        _
      $region10: #{tpu_custom_call.1} parent=5 // pred_check_branch
        %231 = sbr.rel (%p228) target = $region12
      $region11: #{tpu_custom_call.1} parent=5 // pred_region
        %s232 = ssub.s32 %s27, 1
      $region12: #{tpu_custom_call.1} parent=5 // pred_fallthru
        _
      %p233 = scmp.lt.s32.totalorder %s27, 2
      // Predicated region
      $region13: #{tpu_custom_call.1} parent=5 // pred_check
        %p234 = pneg %p233
      $region14: #{tpu_custom_call.1} parent=5 // pred_check_branch
        %236 = sbr.rel (%p234) target = $region16
      $region15: #{tpu_custom_call.1} parent=5 // pred_region
        // Predicated region
        $region17: #{tpu_custom_call.1} parent=15 // pred_check
          %p237 = pneg %p70
        $region18: #{tpu_custom_call.1} parent=15 // pred_check_branch
          %239 = sbr.rel (%p237) target = $region20
        $region19: #{tpu_custom_call.1} parent=15 // pred_region
          %s240 = sand.u32 %s60, 1
          %s241 = scalar_lea.sflag [#allocation7], %s240
          %s242 = sand.u32 %s60, 1
          %s243 = smul.addr %s242, 8
          %s244 = scalar_lea.vmem [#allocation6], %s243
          %s245 = sadd.s32 %s35, %s36
          %s247 = ssub.s32 128, 128
          %248 = vsyncadd %s241, %s247
          %s249 = smul.addr %s34, 4
          %s250 = sadd.s32 %s245, %s249
          %s251 = smul.addr %s250, 32
          %s252 = scalar_lea.hbm %s0, %s251
          %s253 = sshll.u32 %s244, 4
          %s254 = int_to_ptr.vmem [resolvable:$true] %s253
          %259 = dma.hbm_to_vmem [thread:$0]  %s252, 128, %s254, %s241, 32, 32, 2
        $region20: #{tpu_custom_call.1} parent=15 // pred_fallthru
          _
        // Predicated region
        $region21: #{tpu_custom_call.1} parent=15 // pred_check
          %p260 = pneg %p100
        $region22: #{tpu_custom_call.1} parent=15 // pred_check_branch
          %262 = sbr.rel (%p260) target = $region24
        $region23: #{tpu_custom_call.1} parent=15 // pred_region
          %s263 = sand.u32 %s90, 1
          %s264 = scalar_lea.sflag [#allocation10], %s263
          %s265 = sand.u32 %s90, 1
          %s266 = smul.addr %s265, 8
          %s267 = scalar_lea.vmem [#allocation9], %s266
          %s268 = sadd.s32 %s35, %s36
          %s270 = ssub.s32 128, 128
          %271 = vsyncadd %s264, %s270
          %s272 = smul.addr %s34, 4
          %s273 = sadd.s32 %s268, %s272
          %s274 = smul.addr %s273, 32
          %s275 = scalar_lea.hbm %s1, %s274
          %s276 = sshll.u32 %s267, 4
          %s277 = int_to_ptr.vmem [resolvable:$true] %s276
          %282 = dma.hbm_to_vmem [thread:$0]  %s275, 128, %s277, %s264, 32, 32, 2
        $region24: #{tpu_custom_call.1} parent=15 // pred_fallthru
          _
      $region16: #{tpu_custom_call.1} parent=5 // pred_fallthru
        _
      %p283 = scmp.le.s32.totalorder 1, %s27
      %p284 = scmp.lt.s32.totalorder %s27, 3
      %p285 = pnand %p283, %p284
      %p286 = pneg %p285
      // Predicated region
      $region25: #{tpu_custom_call.1} parent=5 // pred_check
        _
      $region26: #{tpu_custom_call.1} parent=5 // pred_check_branch
        %288 = sbr.rel (%p285) target = $region28
      $region27: #{tpu_custom_call.1} parent=5 // pred_region
        %s289 = ssub.s32 %s27, 1
        %s290 = sand.u32 %s63, 1
        %s291 = scalar_lea.sflag [#allocation7], %s290
        %s292 = sand.u32 %s63, 1
        %s293 = smul.addr %s292, 8
        %s294 = scalar_lea.vmem [#allocation6], %s293
        // Predicated region
        $region29: #{tpu_custom_call.1} parent=27 // pred_check
          %p295 = pneg %p76
        $region30: #{tpu_custom_call.1} parent=27 // pred_check_branch
          %297 = sbr.rel (%p295) target = $region32
        $region31: #{tpu_custom_call.1} parent=27 // pred_region
          %298 = dma.done %s291, 128
        $region32: #{tpu_custom_call.1} parent=27 // pred_fallthru
          _
        %s299 = sand.u32 %s93, 1
        %s300 = scalar_lea.sflag [#allocation10], %s299
        %s301 = sand.u32 %s93, 1
        %s302 = smul.addr %s301, 8
        %s303 = scalar_lea.vmem [#allocation9], %s302
        // Predicated region
        $region33: #{tpu_custom_call.1} parent=27 // pred_check
          %p304 = pneg %p106
        $region34: #{tpu_custom_call.1} parent=27 // pred_check_branch
          %306 = sbr.rel (%p304) target = $region36
        $region35: #{tpu_custom_call.1} parent=27 // pred_region
          %307 = dma.done %s300, 128
        $region36: #{tpu_custom_call.1} parent=27 // pred_fallthru
          _
        %s308 = sand.u32 %s63, 1
        %s309 = scalar_lea.sflag [#allocation7], %s308
        %s310 = sand.u32 %s63, 1
        %s311 = smul.addr %s310, 8
        %s312 = scalar_lea.vmem [#allocation6], %s311
        %p313 = pneg %p76
        %p314 = pneg %p73
        %s315 = sand.u32 %s93, 1
        %s316 = scalar_lea.sflag [#allocation10], %s315
        %s317 = sand.u32 %s93, 1
        %s318 = smul.addr %s317, 8
        %s319 = scalar_lea.vmem [#allocation9], %s318
        %p320 = pneg %p106
        %p321 = pneg %p103
        %p322 = pneg %p134
        %p323 = pneg %p131
        %s324 = sand.u32 %s121, 1
        %s325 = scalar_lea.sflag [#allocation8], %s324
        %s326 = sand.u32 %s121, 1
        %s327 = scalar_lea.vmem [#allocation11], %s326
        %p328 = pneg %p162
        %p329 = pneg %p159
        %s330 = sand.u32 %s32, 1
        %s331 = scalar_lea.sflag [#allocation13], %s330
        %s332 = sand.u32 %s149, 1
        %s333 = smul.addr %s332, 4
        %s334 = scalar_lea.vmem [#allocation12], %s333
        %p335 = pneg %p190
        %p336 = pneg %p187
        %s337 = sand.u32 %s32, 1
        %s338 = scalar_lea.sflag [#allocation13], %s337
        %s339 = sand.u32 %s177, 1
        %s340 = smul.addr %s339, 4
        %s341 = scalar_lea.vmem [#allocation14], %s340
        %p342 = pneg %p218
        %p343 = pneg %p215
        %s344 = sand.u32 %s205, 1
        %s345 = scalar_lea.sflag [#allocation16], %s344
        %s346 = sand.u32 %s205, 1
        %s347 = smul.addr %s346, 4
        %s348 = scalar_lea.vmem [#allocation15], %s347
        %s349 = sadd.s32 %s38, %s39
        %s350 = sadd.s32 %s38, %s39
        %p351 = scmp.eq.s32.totalorder %s39, 0
        // Predicated region
        $region37: #{tpu_custom_call.1} parent=27 // pred_check
          %p352 = pneg %p351
        $region38: #{tpu_custom_call.1} parent=27 // pred_check_branch
          %354 = sbr.rel (%p352) target = $region40
        $region39: #{tpu_custom_call.1} parent=27 // pred_region
          %355 = vst [vmem:[#allocation2] sm:$0x3] 0.0
          %356 = vst [vmem:[#allocation3] sm:$0x3] 0.0
          %357 = vst [vmem:[#allocation3 + $0x2] sm:$0x3] 0.0
          %358 = vst [vmem:[#allocation3 + $0x4] sm:$0x3] 0.0
          %359 = vst [vmem:[#allocation3 + $0x6] sm:$0x3] 0.0
          %360 = vst [vmem:[#allocation4] sm:$0x3] 0.0
          %361 = vst [vmem:[#allocation4 + $0x2] sm:$0x3] 0.0
          %362 = vst [vmem:[#allocation4 + $0x4] sm:$0x3] 0.0
          %363 = vst [vmem:[#allocation4 + $0x6] sm:$0x3] 0.0
          %364 = vst [vmem:[#allocation5] sm:$0x3] 0.0
          %365 = vst [vmem:[#allocation5 + $0x2] sm:$0x3] 0.0
          %366 = vst [vmem:[#allocation5 + $0x4] sm:$0x3] 0.0
          %367 = vst [vmem:[#allocation5 + $0x6] sm:$0x3] 0.0
        $region40: #{tpu_custom_call.1} parent=27 // pred_fallthru
          _
        %v368 = vld [vmem:[%s294] sm:$0x3]
        %v369 = vld [vmem:[%s294 + $0x2] sm:$0x3]
        %v370 = vld [vmem:[%s294 + $0x4] sm:$0x3]
        %v371 = vld [vmem:[%s294 + $0x6] sm:$0x3]
        %v372 = vld [vmem:[%s303] sm:$0x3]
        %v373 = vld [vmem:[%s303 + $0x2] sm:$0x3]
        %v374 = vld [vmem:[%s303 + $0x4] sm:$0x3]
        %v375 = vld [vmem:[%s303 + $0x6] sm:$0x3]
        %vm376 = vcmask 1041408
        %v377 = vsel %vm376, %v368, -inf
        %v378 = vsel %vm376, %v369, -inf
        %v379 = vsel %vm376, %v370, -inf
        %v380 = vsel %vm376, %v371, -inf
        %v381 = vmax.f32 %v377, %v378
        %v382 = vmax.f32 %v379, %v380
        %v383 = vmax.f32 %v381, %v382
        %v384 = vsub.f32 %v368, %v383
        %v385 = vsub.f32 %v369, %v383
        %v386 = vsub.f32 %v370, %v383
        %v387 = vsub.f32 %v371, %v383
        %v388 = vmul.f32 %v384, 1.442695
        %v389 = vpow.pop %v388
        %v390 = vmul.f32 %v385, 1.442695
        %v391 = vpow.pop %v390
        %v392 = vmul.f32 %v386, 1.442695
        %v393 = vpow.pop %v392
        %v394 = vmul.f32 %v387, 1.442695
        %v395 = vpow.pop %v394
        %v396 = vsel %vm376, %v389, 0.0
        %v397 = vsel %vm376, %v391, 0.0
        %v398 = vadd.f32 %v396, %v397
        %v399 = vsel %vm376, %v393, 0.0
        %v400 = vadd.f32 %v398, %v399
        %v401 = vsel %vm376, %v395, 0.0
        %v402 = vadd.f32 %v400, %v401
        %v403 = vrcp.pop %v402
        %v404 = vmul.f32 %v402, %v403
        %v405 = vsub.f32 2.0, %v404
        %v406 = vmul.f32 %v403, %v405
        %v407 = vmul.f32 %v389, %v406
        %v408 = vmul.f32 %v391, %v406
        %v409 = vmul.f32 %v393, %v406
        %v410 = vmul.f32 %v395, %v406
        %v411 = vlog2.pop %v402
        %v412 = vmul.f32 %v411, 0.6931472
        %v413 = vsub.f32 %v384, %v412
        %v414 = vsub.f32 %v385, %v412
        %v415 = vsub.f32 %v386, %v412
        %v416 = vsub.f32 %v387, %v412
        %v417 = vmul.f32 %v372, %v413
        %v418 = vmul.f32 %v373, %v414
        %v419 = vmul.f32 %v374, %v415
        %v420 = vmul.f32 %v375, %v416
        %v421 = vsel %vm376, %v417, 0.0
        %v422 = vsel %vm376, %v418, 0.0
        %v423 = vadd.f32 %v421, %v422
        %v424 = vsel %vm376, %v419, 0.0
        %v425 = vadd.f32 %v423, %v424
        %v426 = vsel %vm376, %v420, 0.0
        %v427 = vadd.f32 %v425, %v426
        %v428 = vmul.f32 %v407, %v372
        %v429 = vmul.f32 %v408, %v373
        %v430 = vmul.f32 %v409, %v374
        %v431 = vmul.f32 %v410, %v375
        %v432 = vmul.f32 %v407, %v407
        %v433 = vmul.f32 %v408, %v408
        %v434 = vmul.f32 %v409, %v409
        %v435 = vmul.f32 %v410, %v410
        %v436 = vmul.f32 %v372, %v372
        %v437 = vmul.f32 %v373, %v373
        %v438 = vmul.f32 %v374, %v374
        %v439 = vmul.f32 %v375, %v375
        %v440 = vld [vmem:[#allocation2] sm:$0x3]
        %v441 = vadd.f32 %v440, %v427
        %442 = vst [vmem:[#allocation2] sm:$0x3] %v441
        %v443 = vld [vmem:[#allocation3] sm:$0x3]
        %v444 = vld [vmem:[#allocation3 + $0x2] sm:$0x3]
        %v445 = vld [vmem:[#allocation3 + $0x4] sm:$0x3]
        %v446 = vld [vmem:[#allocation3 + $0x6] sm:$0x3]
        %v447 = vadd.f32 %v443, %v428
        %v448 = vadd.f32 %v444, %v429
        %v449 = vadd.f32 %v445, %v430
        %v450 = vadd.f32 %v446, %v431
        %451 = vst [vmem:[#allocation3] sm:$0x3] %v447
        %452 = vst [vmem:[#allocation3 + $0x2] sm:$0x3] %v448
        %453 = vst [vmem:[#allocation3 + $0x4] sm:$0x3] %v449
        %454 = vst [vmem:[#allocation3 + $0x6] sm:$0x3] %v450
        %v455 = vld [vmem:[#allocation4] sm:$0x3]
        %v456 = vld [vmem:[#allocation4 + $0x2] sm:$0x3]
        %v457 = vld [vmem:[#allocation4 + $0x4] sm:$0x3]
        %v458 = vld [vmem:[#allocation4 + $0x6] sm:$0x3]
        %v459 = vadd.f32 %v455, %v432
        %v460 = vadd.f32 %v456, %v433
        %v461 = vadd.f32 %v457, %v434
        %v462 = vadd.f32 %v458, %v435
        %463 = vst [vmem:[#allocation4] sm:$0x3] %v459
        %464 = vst [vmem:[#allocation4 + $0x2] sm:$0x3] %v460
        %465 = vst [vmem:[#allocation4 + $0x4] sm:$0x3] %v461
        %466 = vst [vmem:[#allocation4 + $0x6] sm:$0x3] %v462
        %v467 = vld [vmem:[#allocation5] sm:$0x3]
        %v468 = vld [vmem:[#allocation5 + $0x2] sm:$0x3]
        %v469 = vld [vmem:[#allocation5 + $0x4] sm:$0x3]
        %v470 = vld [vmem:[#allocation5 + $0x6] sm:$0x3]
        %v471 = vadd.f32 %v467, %v436
        %v472 = vadd.f32 %v468, %v437
        %v473 = vadd.f32 %v469, %v438
        %v474 = vadd.f32 %v470, %v439
        %475 = vst [vmem:[#allocation5] sm:$0x3] %v471
        %476 = vst [vmem:[#allocation5 + $0x2] sm:$0x3] %v472
        %477 = vst [vmem:[#allocation5 + $0x4] sm:$0x3] %v473
        %478 = vst [vmem:[#allocation5 + $0x6] sm:$0x3] %v474
        // Predicated region
        $region41: #{tpu_custom_call.1} parent=27 // pred_check
          %p479 = pneg %p351
        $region42: #{tpu_custom_call.1} parent=27 // pred_check_branch
          %481 = sbr.rel (%p479) target = $region44
        $region43: #{tpu_custom_call.1} parent=27 // pred_region
          %v482 = vld [vmem:[#allocation2] sm:$0x3]
          %v483 = vsel %vm376, %v482, 0.0
          %v484 = vrot.slane %v483, 4
          %v485 = vadd.f32 %v483, %v484
          %v486 = vrot.slane %v485, 2
          %v487 = vadd.f32 %v485, %v486
          %v488 = vrot.slane %v487, 1
          %v489 = vadd.f32 %v487, %v488
          %490 = vst [vmem:[%s327] sm:$0x1] %v489
          %v491 = vld [vmem:[#allocation3] sm:$0x3]
          %v492 = vld [vmem:[#allocation3 + $0x2] sm:$0x3]
          %v493 = vld [vmem:[#allocation3 + $0x4] sm:$0x3]
          %v494 = vld [vmem:[#allocation3 + $0x6] sm:$0x3]
          %v495 = vsel %vm376, %v491, 0.0
          %v496 = vrot.slane %v495, 4
          %v497 = vadd.f32 %v495, %v496
          %v498 = vrot.slane %v497, 2
          %v499 = vadd.f32 %v497, %v498
          %v500 = vrot.slane %v499, 1
          %v501 = vadd.f32 %v499, %v500
          %v502 = vsel %vm376, %v492, 0.0
          %v503 = vrot.slane %v502, 4
          %v504 = vadd.f32 %v502, %v503
          %v505 = vrot.slane %v504, 2
          %v506 = vadd.f32 %v504, %v505
          %v507 = vrot.slane %v506, 1
          %v508 = vadd.f32 %v506, %v507
          %v509 = vsel %vm376, %v493, 0.0
          %v510 = vrot.slane %v509, 4
          %v511 = vadd.f32 %v509, %v510
          %v512 = vrot.slane %v511, 2
          %v513 = vadd.f32 %v511, %v512
          %v514 = vrot.slane %v513, 1
          %v515 = vadd.f32 %v513, %v514
          %v516 = vsel %vm376, %v494, 0.0
          %v517 = vrot.slane %v516, 4
          %v518 = vadd.f32 %v516, %v517
          %v519 = vrot.slane %v518, 2
          %v520 = vadd.f32 %v518, %v519
          %v521 = vrot.slane %v520, 1
          %v522 = vadd.f32 %v520, %v521
          %vm527 = vcmask 1041409
          %v528 = vsel %vm527, %v508, %v501
          %vm529 = vcmask 1042434
          %v530 = vsel %vm529, %v515, %v528
          %vm531 = vcmask 1043459
          %v532 = vsel %vm531, %v522, %v530
          %534 = vst [vmem:[%s334] sm:$0xf] %v532
          %v535 = vld [vmem:[#allocation4] sm:$0x3]
          %v536 = vld [vmem:[#allocation4 + $0x2] sm:$0x3]
          %v537 = vld [vmem:[#allocation4 + $0x4] sm:$0x3]
          %v538 = vld [vmem:[#allocation4 + $0x6] sm:$0x3]
          %v539 = vsel %vm376, %v535, 0.0
          %v540 = vrot.slane %v539, 4
          %v541 = vadd.f32 %v539, %v540
          %v542 = vrot.slane %v541, 2
          %v543 = vadd.f32 %v541, %v542
          %v544 = vrot.slane %v543, 1
          %v545 = vadd.f32 %v543, %v544
          %v546 = vsel %vm376, %v536, 0.0
          %v547 = vrot.slane %v546, 4
          %v548 = vadd.f32 %v546, %v547
          %v549 = vrot.slane %v548, 2
          %v550 = vadd.f32 %v548, %v549
          %v551 = vrot.slane %v550, 1
          %v552 = vadd.f32 %v550, %v551
          %v553 = vsel %vm376, %v537, 0.0
          %v554 = vrot.slane %v553, 4
          %v555 = vadd.f32 %v553, %v554
          %v556 = vrot.slane %v555, 2
          %v557 = vadd.f32 %v555, %v556
          %v558 = vrot.slane %v557, 1
          %v559 = vadd.f32 %v557, %v558
          %v560 = vsel %vm376, %v538, 0.0
          %v561 = vrot.slane %v560, 4
          %v562 = vadd.f32 %v560, %v561
          %v563 = vrot.slane %v562, 2
          %v564 = vadd.f32 %v562, %v563
          %v565 = vrot.slane %v564, 1
          %v566 = vadd.f32 %v564, %v565
          %v571 = vsel %vm527, %v552, %v545
          %v572 = vsel %vm529, %v559, %v571
          %v573 = vsel %vm531, %v566, %v572
          %575 = vst [vmem:[%s341] sm:$0xf] %v573
          %v576 = vld [vmem:[#allocation5] sm:$0x3]
          %v577 = vld [vmem:[#allocation5 + $0x2] sm:$0x3]
          %v578 = vld [vmem:[#allocation5 + $0x4] sm:$0x3]
          %v579 = vld [vmem:[#allocation5 + $0x6] sm:$0x3]
          %v580 = vsel %vm376, %v576, 0.0
          %v581 = vrot.slane %v580, 4
          %v582 = vadd.f32 %v580, %v581
          %v583 = vrot.slane %v582, 2
          %v584 = vadd.f32 %v582, %v583
          %v585 = vrot.slane %v584, 1
          %v586 = vadd.f32 %v584, %v585
          %v587 = vsel %vm376, %v577, 0.0
          %v588 = vrot.slane %v587, 4
          %v589 = vadd.f32 %v587, %v588
          %v590 = vrot.slane %v589, 2
          %v591 = vadd.f32 %v589, %v590
          %v592 = vrot.slane %v591, 1
          %v593 = vadd.f32 %v591, %v592
          %v594 = vsel %vm376, %v578, 0.0
          %v595 = vrot.slane %v594, 4
          %v596 = vadd.f32 %v594, %v595
          %v597 = vrot.slane %v596, 2
          %v598 = vadd.f32 %v596, %v597
          %v599 = vrot.slane %v598, 1
          %v600 = vadd.f32 %v598, %v599
          %v601 = vsel %vm376, %v579, 0.0
          %v602 = vrot.slane %v601, 4
          %v603 = vadd.f32 %v601, %v602
          %v604 = vrot.slane %v603, 2
          %v605 = vadd.f32 %v603, %v604
          %v606 = vrot.slane %v605, 1
          %v607 = vadd.f32 %v605, %v606
          %v612 = vsel %vm527, %v593, %v586
          %v613 = vsel %vm529, %v600, %v612
          %v614 = vsel %vm531, %v607, %v613
          %616 = vst [vmem:[%s348] sm:$0xf] %v614
        $region44: #{tpu_custom_call.1} parent=27 // pred_fallthru
          _
        %s617 = sand.u32 %s121, 1
        %s618 = scalar_lea.sflag [#allocation8], %s617
        %s619 = sand.u32 %s121, 1
        %s620 = scalar_lea.vmem [#allocation11], %s619
        %s621 = sand.u32 %s32, 1
        %s622 = scalar_lea.sflag [#allocation13], %s621
        %s623 = sand.u32 %s149, 1
        %s624 = smul.addr %s623, 4
        %s625 = scalar_lea.vmem [#allocation12], %s624
        %s626 = sand.u32 %s32, 1
        %s627 = scalar_lea.sflag [#allocation13], %s626
        %s628 = sand.u32 %s177, 1
        %s629 = smul.addr %s628, 4
        %s630 = scalar_lea.vmem [#allocation14], %s629
        %s631 = sand.u32 %s205, 1
        %s632 = scalar_lea.sflag [#allocation16], %s631
        %s633 = sand.u32 %s205, 1
        %s634 = smul.addr %s633, 4
        %s635 = scalar_lea.vmem [#allocation15], %s634
        // Predicated region
        $region45: #{tpu_custom_call.1} parent=27 // pred_check
          %p636 = pneg %p131
        $region46: #{tpu_custom_call.1} parent=27 // pred_check_branch
          %638 = sbr.rel (%p636) target = $region48
        $region47: #{tpu_custom_call.1} parent=27 // pred_region
          %s640 = ssub.s32 16, 16
          %641 = vsyncadd %s618, %s640
          %s642 = sadd.s32 %s38, %s37
          %s643 = smul.addr %s642, 16
          %s644 = scalar_lea.hbm %s2, %s643
          %s646 = sshll.u32 %s620, 4
          %s647 = int_to_ptr.vmem [resolvable:$true] %s646
          %649 = dma.vmem_to_hbm [thread:$0]  %s647, 16, %s644, %s618
        $region48: #{tpu_custom_call.1} parent=27 // pred_fallthru
          _
        // Predicated region
        $region49: #{tpu_custom_call.1} parent=27 // pred_check
          %p650 = pneg %p159
        $region50: #{tpu_custom_call.1} parent=27 // pred_check_branch
          %652 = sbr.rel (%p650) target = $region52
        $region51: #{tpu_custom_call.1} parent=27 // pred_region
          %s654 = ssub.s32 64, 64
          %655 = vsyncadd %s622, %s654
          %s656 = sadd.s32 %s38, %s37
          %s657 = smul.addr %s656, 64
          %s658 = scalar_lea.hbm %s3, %s657
          %s660 = sshll.u32 %s625, 4
          %s661 = int_to_ptr.vmem [resolvable:$true] %s660
          %663 = dma.vmem_to_hbm [thread:$0]  %s661, 64, %s658, %s622
        $region52: #{tpu_custom_call.1} parent=27 // pred_fallthru
          _
        // Predicated region
        $region53: #{tpu_custom_call.1} parent=27 // pred_check
          %p664 = pneg %p187
        $region54: #{tpu_custom_call.1} parent=27 // pred_check_branch
          %666 = sbr.rel (%p664) target = $region56
        $region55: #{tpu_custom_call.1} parent=27 // pred_region
          %s668 = ssub.s32 64, 64
          %669 = vsyncadd %s627, %s668
          %s670 = sadd.s32 %s38, %s37
          %s671 = smul.addr %s670, 64
          %s672 = scalar_lea.hbm %s4, %s671
          %s674 = sshll.u32 %s630, 4
          %s675 = int_to_ptr.vmem [resolvable:$true] %s674
          %677 = dma.vmem_to_hbm [thread:$0]  %s675, 64, %s672, %s627
        $region56: #{tpu_custom_call.1} parent=27 // pred_fallthru
          _
        // Predicated region
        $region57: #{tpu_custom_call.1} parent=27 // pred_check
          %p678 = pneg %p215
        $region58: #{tpu_custom_call.1} parent=27 // pred_check_branch
          %680 = sbr.rel (%p678) target = $region60
        $region59: #{tpu_custom_call.1} parent=27 // pred_region
          %s682 = ssub.s32 64, 64
          %683 = vsyncadd %s632, %s682
          %s684 = sadd.s32 %s38, %s37
          %s685 = smul.addr %s684, 64
          %s686 = scalar_lea.hbm %s5, %s685
          %s688 = sshll.u32 %s635, 4
          %s689 = int_to_ptr.vmem [resolvable:$true] %s688
          %691 = dma.vmem_to_hbm [thread:$0]  %s689, 64, %s686, %s632
        $region60: #{tpu_custom_call.1} parent=27 // pred_fallthru
          _
      $region28: #{tpu_custom_call.1} parent=5 // pred_fallthru
        _
      %p692 = scmp.le.s32.totalorder 2, %s27
      // Predicated region
      $region61: #{tpu_custom_call.1} parent=5 // pred_check
        %p693 = pneg %p692
      $region62: #{tpu_custom_call.1} parent=5 // pred_check_branch
        %695 = sbr.rel (%p693) target = $region64
      $region63: #{tpu_custom_call.1} parent=5 // pred_region
        %s696 = ssub.s32 %s27, 2
        // Predicated region
        $region65: #{tpu_custom_call.1} parent=63 // pred_check
          %p697 = pneg %p137
        $region66: #{tpu_custom_call.1} parent=63 // pred_check_branch
          %699 = sbr.rel (%p697) target = $region68
        $region67: #{tpu_custom_call.1} parent=63 // pred_region
          %s700 = sand.u32 %s122, 1
          %s701 = scalar_lea.sflag [#allocation8], %s700
          %s702 = sand.u32 %s122, 1
          %s703 = scalar_lea.vmem [#allocation11], %s702
          %704 = dma.done %s701, 16
        $region68: #{tpu_custom_call.1} parent=63 // pred_fallthru
          _
        // Predicated region
        $region69: #{tpu_custom_call.1} parent=63 // pred_check
          %p705 = pneg %p165
        $region70: #{tpu_custom_call.1} parent=63 // pred_check_branch
          %707 = sbr.rel (%p705) target = $region72
        $region71: #{tpu_custom_call.1} parent=63 // pred_region
          %s708 = sand.u32 %s33, 1
          %s709 = scalar_lea.sflag [#allocation13], %s708
          %s710 = sand.u32 %s150, 1
          %s711 = smul.addr %s710, 4
          %s712 = scalar_lea.vmem [#allocation12], %s711
          %713 = dma.done %s709, 64
        $region72: #{tpu_custom_call.1} parent=63 // pred_fallthru
          _
        // Predicated region
        $region73: #{tpu_custom_call.1} parent=63 // pred_check
          %p714 = pneg %p193
        $region74: #{tpu_custom_call.1} parent=63 // pred_check_branch
          %716 = sbr.rel (%p714) target = $region76
        $region75: #{tpu_custom_call.1} parent=63 // pred_region
          %s717 = sand.u32 %s33, 1
          %s718 = scalar_lea.sflag [#allocation13], %s717
          %s719 = sand.u32 %s178, 1
          %s720 = smul.addr %s719, 4
          %s721 = scalar_lea.vmem [#allocation14], %s720
          %722 = dma.done %s718, 64
        $region76: #{tpu_custom_call.1} parent=63 // pred_fallthru
          _
        // Predicated region
        $region77: #{tpu_custom_call.1} parent=63 // pred_check
          %p723 = pneg %p221
        $region78: #{tpu_custom_call.1} parent=63 // pred_check_branch
          %725 = sbr.rel (%p723) target = $region80
        $region79: #{tpu_custom_call.1} parent=63 // pred_region
          %s726 = sand.u32 %s206, 1
          %s727 = scalar_lea.sflag [#allocation16], %s726
          %s728 = sand.u32 %s206, 1
          %s729 = smul.addr %s728, 4
          %s730 = scalar_lea.vmem [#allocation15], %s729
          %731 = dma.done %s727, 64
        $region80: #{tpu_custom_call.1} parent=63 // pred_fallthru
          _
      $region64: #{tpu_custom_call.1} parent=5 // pred_fallthru
        _
    $region6: #{tpu_custom_call.1} parent=1 // loop_footer
      %s31 = sadd.s32 1, %s27
    $region7: #{tpu_custom_call.1} parent=1 // loop_footer_branch
      %26 = sbr.rel target = $region3
    $region8: #{tpu_custom_call.1} parent=1 // loop_exit
      _
    %732 = vsyncpa [#allocation7], 1
    %s733 = scalar_lea.sflag [#allocation7], 1
    %734 = vsyncpa %s733, 1
    %735 = vsyncpa [#allocation10], 1
    %s736 = scalar_lea.sflag [#allocation10], 1
    %737 = vsyncpa %s736, 1
    %738 = vsyncpa [#allocation8], 1
    %s739 = scalar_lea.sflag [#allocation8], 1
    %740 = vsyncpa %s739, 1
    %741 = vsyncpa [#allocation13], 1
    %s742 = scalar_lea.sflag [#allocation13], 1
    %743 = vsyncpa %s742, 1
    %744 = vsyncpa [#allocation16], 1
    %s745 = scalar_lea.sflag [#allocation16], 1
    %746 = vsyncpa %s745, 1

</llo_original>
